<compile_context>
chip_gen: v5e
topology: v5e:2x2
jax: 0.10.0
libtpu: 0.0.40
codegen_flags: <defaults>
</compile_context>

<pallas_src>
import jax
import jax.numpy as jnp
from jax.experimental import pallas as pl
from jax.experimental.pallas import tpu as pltpu


def _round_up(v: int, m: int) -> int:
    return ((v + m - 1) // m) * m


def mlp_kernel(x_ref, w0_ref, w1_ref, w2_ref, o_ref):
    """Fused 3-layer MLP on one batch tile: relu(relu(x @ w0) @ w1) @ w2.

    x / w* are bf16; dots accumulate in f32; ReLU runs on the f32 accumulator.
    Weights are full-array blocks (resident in VMEM across all grid steps).
    """
    x = x_ref[...]                                                  # (tm, D_in) bf16
    h = jnp.dot(x, w0_ref[...], preferred_element_type=jnp.float32)
    h = jnp.maximum(h, 0.0)                                         # ReLU (f32)
    h = jnp.dot(h.astype(jnp.bfloat16), w1_ref[...],
                preferred_element_type=jnp.float32)
    h = jnp.maximum(h, 0.0)                                         # ReLU (f32)
    y = jnp.dot(h.astype(jnp.bfloat16), w2_ref[...],
                preferred_element_type=jnp.float32)
    o_ref[...] = y.astype(o_ref.dtype)                              # lane-dense (tm, 128k)


def prepare_params(weights, lane=128, dtype=jnp.bfloat16):
    """One-time weight prep (outside the forward hot path).

    Transposes PyTorch-layout (out, in) weights to (in, out), zero-pads both
    dims up to multiples of `lane`, and casts to bf16 for the MXU.
    """
    prepared = []
    for w in weights:
        wt = jnp.asarray(w).T                                       # (in, out)
        in_d, out_d = wt.shape
        in_p = _round_up(in_d, lane)
        out_p = _round_up(out_d, lane)
        wt = jnp.pad(wt, ((0, in_p - in_d), (0, out_p - out_d)))
        prepared.append(wt.astype(dtype))
    return prepared


def mlp_forward(x_nchw, params, num_classes, *, tm_max=256):
    """Run the fused MLP kernel.

    Args:
      x_nchw: (N, C, H, W) float32 input.
      params: output of prepare_params() — bf16 (in_padded, out_padded) weights.
      num_classes: true (unpadded) number of output classes.
    Returns:
      (N, num_classes) float32 logits.
    """
    n = x_nchw.shape[0]
    d_in = x_nchw.shape[1] * x_nchw.shape[2] * x_nchw.shape[3]
    x = x_nchw.reshape(n, d_in)                     # == torch x.view(-1, input_size)

    w0, w1, w2 = params
    d_in_p = w0.shape[0]
    c_p = w2.shape[1]

    # Batch tile: multiple of 8 sublanes, up to tm_max; pad N up to a whole
    # number of tiles.  (tm_max=256 keeps 2x-buffered tiles + resident weights
    # far below v7x's 64 MiB VMEM.)
    tm = min(tm_max, _round_up(n, 8))
    n_p = _round_up(n, tm)

    x = jnp.pad(x, ((0, n_p - n), (0, d_in_p - d_in))).astype(jnp.bfloat16)

    grid = (n_p // tm,)

    flops = 2 * n_p * sum(w.shape[0] * w.shape[1] for w in params)
    bytes_accessed = (x.size * x.dtype.itemsize
                      + sum(w.size * w.dtype.itemsize for w in params)
                      + n_p * c_p * 4)
    cost = pl.CostEstimate(flops=flops, transcendentals=0,
                           bytes_accessed=bytes_accessed)

    out = pl.pallas_call(
        mlp_kernel,
        out_shape=jax.ShapeDtypeStruct((n_p, c_p), jnp.float32),
        grid_spec=pltpu.PrefetchScalarGridSpec(
            num_scalar_prefetch=0,
            grid=grid,
            in_specs=[
                pl.BlockSpec((tm, d_in_p), lambda i: (i, 0)),   # batch-tiled x
                pl.BlockSpec(w0.shape, lambda i: (0, 0)),       # weights resident
                pl.BlockSpec(w1.shape, lambda i: (0, 0)),
                pl.BlockSpec(w2.shape, lambda i: (0, 0)),
            ],
            out_specs=pl.BlockSpec((tm, c_p), lambda i: (i, 0)),
        ),
        compiler_params=pltpu.CompilerParams(
            dimension_semantics=("parallel",)),     # megacore-shardable on v7x
        cost_estimate=cost,
    )(x, w0, w1, w2)

    return out[:n, :num_classes]


def init_params(key, input_size, hidden_sizes, num_classes):
    """Deterministic Kaiming-uniform-ish init for each Linear (bias=False).

    Returns PyTorch-layout (out_features, in_features) f32 weights.
    """
    layer_sizes = [input_size] + list(hidden_sizes) + [num_classes]
    params = []
    for idx in range(len(layer_sizes) - 1):
        fan_in = layer_sizes[idx]
        fan_out = layer_sizes[idx + 1]
        key, sub = jax.random.split(key)
        bound = jnp.sqrt(6.0 / fan_in)               # kaiming_uniform_ bound
        w = jax.random.uniform(sub, (fan_out, fan_in), jnp.float32,
                               minval=-bound, maxval=bound)
        params.append(w)
    return params


if __name__ == "__main__":
    # Module config (defaults: bias=False, no dropout/residual/batch_norm).
    channels, height, width = 4, 16, 16
    input_size = channels * height * width           # 1024
    hidden_sizes = (32, 32)
    num_classes = 10
    batch = 2

    key = jax.random.PRNGKey(0)
    key, xkey = jax.random.split(key)
    x = jax.random.normal(xkey, (batch, channels, height, width), jnp.float32)

    w0, w1, w2 = init_params(key, input_size, hidden_sizes, num_classes)

    # One-time param prep (transpose / pad / bf16) — hoisted out of forward.
    params = prepare_params([w0, w1, w2])

    out = mlp_forward(x, params, num_classes)
    out = jax.block_until_ready(out)

    # Reference check in plain JAX, same bf16-in / f32-accumulate math.
    xf = x.reshape(batch, input_size)
    ref = jnp.maximum(jnp.dot(xf.astype(jnp.bfloat16), w0.T.astype(jnp.bfloat16),
                              preferred_element_type=jnp.float32), 0.0)
    ref = jnp.maximum(jnp.dot(ref.astype(jnp.bfloat16), w1.T.astype(jnp.bfloat16),
                              preferred_element_type=jnp.float32), 0.0)
    ref = jnp.dot(ref.astype(jnp.bfloat16), w2.T.astype(jnp.bfloat16),
                  preferred_element_type=jnp.float32)

    assert out.shape == (batch, num_classes)
    assert jnp.allclose(out, ref, atol=2e-2, rtol=2e-2)

    print("KERNEL_OK")
</pallas_src>

<mosaic_0001>
module attributes {stable_mosaic.version = 11 : i64} {
  func.func @mlp_kernel(%arg0: i32, %arg1: memref<8x1024xbf16, #tpu.memory_space<vmem>>, %arg2: memref<1024x128xbf16, #tpu.memory_space<vmem>>, %arg3: memref<128x128xbf16, #tpu.memory_space<vmem>>, %arg4: memref<128x128xbf16, #tpu.memory_space<vmem>>, %arg5: memref<8x128xf32, #tpu.memory_space<vmem>>) attributes {dimension_semantics = [#tpu.dimension_semantics<parallel>], iteration_bounds = array<i64: 1>, scalar_prefetch = 0 : i64, scratch_operands = 0 : i64, tpu.core_type = #tpu.core_type<tc>, window_params = [{transform_indices = @transform_0, window_bounds = array<i64: 8, 1024>}, {pipeline_mode = #tpu.pipeline_mode<synchronous>, transform_indices = @transform_1, window_bounds = array<i64: 1024, 128>}, {pipeline_mode = #tpu.pipeline_mode<synchronous>, transform_indices = @transform_2, window_bounds = array<i64: 128, 128>}, {pipeline_mode = #tpu.pipeline_mode<synchronous>, transform_indices = @transform_3, window_bounds = array<i64: 128, 128>}, {transform_indices = @transform_4, window_bounds = array<i64: 8, 128>}]} {
    %c0 = arith.constant 0 : index
    %c0_0 = arith.constant 0 : index
    %0 = vector.load %arg1[%c0, %c0_0] : memref<8x1024xbf16, #tpu.memory_space<vmem>>, vector<8x1024xbf16>
    %c0_1 = arith.constant 0 : index
    %c0_2 = arith.constant 0 : index
    %1 = vector.load %arg2[%c0_1, %c0_2] : memref<1024x128xbf16, #tpu.memory_space<vmem>>, vector<1024x128xbf16>
    %cst = arith.constant dense<0.000000e+00> : vector<8x128xf32>
    %2 = tpu.matmul %0, %1, %cst {dimension_numbers = #tpu.dot_dimension_numbers<[1], [0], [0], [1], [0, 0, 1, 1], [], []>} : vector<8x1024xbf16>, vector<1024x128xbf16>, vector<8x128xf32> -> vector<8x128xf32>
    %cst_3 = arith.constant 0.000000e+00 : f32
    %3 = vector.broadcast %cst_3 : f32 to vector<8x128xf32>
    %4 = arith.maximumf %2, %3 : vector<8x128xf32>
    %5 = arith.truncf %4 : vector<8x128xf32> to vector<8x128xbf16>
    %c0_4 = arith.constant 0 : index
    %c0_5 = arith.constant 0 : index
    %6 = vector.load %arg3[%c0_4, %c0_5] : memref<128x128xbf16, #tpu.memory_space<vmem>>, vector<128x128xbf16>
    %cst_6 = arith.constant dense<0.000000e+00> : vector<8x128xf32>
    %7 = tpu.matmul %5, %6, %cst_6 {dimension_numbers = #tpu.dot_dimension_numbers<[1], [0], [0], [1], [0, 0, 1, 1], [], []>} : vector<8x128xbf16>, vector<128x128xbf16>, vector<8x128xf32> -> vector<8x128xf32>
    %cst_7 = arith.constant 0.000000e+00 : f32
    %8 = vector.broadcast %cst_7 : f32 to vector<8x128xf32>
    %9 = arith.maximumf %7, %8 : vector<8x128xf32>
    %10 = arith.truncf %9 : vector<8x128xf32> to vector<8x128xbf16>
    %c0_8 = arith.constant 0 : index
    %c0_9 = arith.constant 0 : index
    %11 = vector.load %arg4[%c0_8, %c0_9] : memref<128x128xbf16, #tpu.memory_space<vmem>>, vector<128x128xbf16>
    %cst_10 = arith.constant dense<0.000000e+00> : vector<8x128xf32>
    %12 = tpu.matmul %10, %11, %cst_10 {dimension_numbers = #tpu.dot_dimension_numbers<[1], [0], [0], [1], [0, 0, 1, 1], [], []>} : vector<8x128xbf16>, vector<128x128xbf16>, vector<8x128xf32> -> vector<8x128xf32>
    %c0_11 = arith.constant 0 : index
    %c0_12 = arith.constant 0 : index
    %13 = vector.load %arg5[%c0_11, %c0_12] : memref<8x128xf32, #tpu.memory_space<vmem>>, vector<8x128xf32>
    tpu.vector_store %arg5[%c0_11, %c0_12], %12 {strides = array<i32>} : memref<8x128xf32, #tpu.memory_space<vmem>>, vector<8x128xf32>,
    return
  }
  func.func @transform_0(%arg0: i32) -> (i32, i32) {
    %c0_i32 = arith.constant 0 : i32
    %c0_i32_0 = arith.constant 0 : i32
    return %arg0, %c0_i32 : i32, i32
  }
  func.func @transform_1(%arg0: i32) -> (i32, i32) {
    %c0_i32 = arith.constant 0 : i32
    %c0_i32_0 = arith.constant 0 : i32
    %c0_i32_1 = arith.constant 0 : i32
    return %c0_i32, %c0_i32_0 : i32, i32
  }
  func.func @transform_2(%arg0: i32) -> (i32, i32) {
    %c0_i32 = arith.constant 0 : i32
    %c0_i32_0 = arith.constant 0 : i32
    %c0_i32_1 = arith.constant 0 : i32
    return %c0_i32, %c0_i32_0 : i32, i32
  }
  func.func @transform_3(%arg0: i32) -> (i32, i32) {
    %c0_i32 = arith.constant 0 : i32
    %c0_i32_0 = arith.constant 0 : i32
    %c0_i32_1 = arith.constant 0 : i32
    return %c0_i32, %c0_i32_0 : i32, i32
  }
  func.func @transform_4(%arg0: i32) -> (i32, i32) {
    %c0_i32 = arith.constant 0 : i32
    %c0_i32_0 = arith.constant 0 : i32
    return %arg0, %c0_i32 : i32, i32
  }
}

</mosaic_0001>

<llo_original>
// kernel: tpu_custom_call.1
$region0: #{tpu_custom_call.1}
  #allocation0 [shape = 'u32[]', space=smem, size = 0x4, offset = 0x4, fixed_abs, tag = 'smem constant byte address 0x4 - core index']
  #allocation1 [shape = 'u32[72,128]{1,0:T(1,128)}', space=vmem, size = 0x9000, scoped, tag = 'internal scratch']
  %s0 = inlined_call_operand.hbm [shape: bf16[8,1024], index: 0, kind: input, shape index: {}]
  %s1 = inlined_call_operand.hbm [shape: bf16[1024,128], index: 1, kind: input, shape index: {}]
  %s2 = inlined_call_operand.hbm [shape: bf16[128,128], index: 2, kind: input, shape index: {}]
  %s3 = inlined_call_operand.hbm [shape: bf16[128,128], index: 3, kind: input, shape index: {}]
  %s4 = inlined_call_operand.hbm [shape: f32[8,128], index: 4, kind: output, shape index: {}]
  %s5 = sld [smem:[#allocation0]]
  $region42: #{tpu_custom_call.1} parent=0
    _
  %s7 = ssub.s32 1, %s5
  %s8 = scalar_select 0, %s7, %s5
  $region1: #{tpu_custom_call.1} parent=0
    #allocation2 [shape = 'u8[16384]{0}', space=vmem, size = 0x4000, scoped, tag = 'input window, operand 0, single buffered']
    #allocation3 [shape = 's32[1]{0}', space=sflag, size = 0x4, scoped, tag = 'scoped memory for tpu_custom_call.1']
    #allocation4 [shape = 's32[1]{0}', space=sflag, size = 0x4, scoped, tag = 'scoped memory for tpu_custom_call.1']
    #allocation5 [shape = 'u8[262144]{0}', space=vmem, size = 0x40000, scoped, tag = 'input window, operand 1, single buffered']
    #allocation6 [shape = 's32[1]{0}', space=sflag, size = 0x4, scoped, tag = 'scoped memory for tpu_custom_call.1']
    #allocation7 [shape = 'u8[32768]{0}', space=vmem, size = 0x8000, scoped, tag = 'input window, operand 2, single buffered']
    #allocation8 [shape = 'u8[32768]{0}', space=vmem, size = 0x8000, scoped, tag = 'input window, operand 3, single buffered']
    #allocation9 [shape = 's32[1]{0}', space=sflag, size = 0x4, scoped, tag = 'scoped memory for tpu_custom_call.1']
    #allocation10 [shape = 'u8[4096]{0}', space=vmem, size = 0x1000, scoped, tag = 'output window, operand 0, single buffered']
    %9 = vsyncpa [#allocation3], 0
    %10 = vsyncpa [#allocation6], 0
    %11 = vsyncpa [#allocation9], 0
    %12 = vsyncpa [#allocation4], 0
    // Predicated region
    $region2: #{tpu_custom_call.1} parent=1 // pred_check
      _
    $region3: #{tpu_custom_call.1} parent=1 // pred_check_branch
      %14 = sbr.rel (0) target = $region5
    $region4: #{tpu_custom_call.1} parent=1 // pred_region
      %16 = vsyncadd [#allocation3], 0
      %s18 = sshll.u32 %s0, 4
      %s19 = int_to_ptr.hbm [resolvable:$true] %s18
      %s20 = sshll.u32 [#allocation2], 4
      %s21 = int_to_ptr.vmem [resolvable:$true] %s20
      %23 = dma.hbm_to_vmem [thread:$0]  %s19, 512, %s21, [#allocation3]
    $region5: #{tpu_custom_call.1} parent=1 // pred_fallthru
      _
    // Predicated region
    $region6: #{tpu_custom_call.1} parent=1 // pred_check
      _
    $region7: #{tpu_custom_call.1} parent=1 // pred_check_branch
      %25 = sbr.rel (0) target = $region9
    $region8: #{tpu_custom_call.1} parent=1 // pred_region
      %27 = vsyncadd [#allocation6], 0
      %s28 = sshll.u32 %s1, 4
      %s29 = int_to_ptr.hbm [resolvable:$true] %s28
      %s30 = sshll.u32 [#allocation5], 4
      %s31 = int_to_ptr.vmem [resolvable:$true] %s30
      %36 = dma.hbm_to_vmem [thread:$0]  %s29, 8192, %s31, [#allocation6], 64, 64, 4
    $region9: #{tpu_custom_call.1} parent=1 // pred_fallthru
      _
    // Predicated region
    $region10: #{tpu_custom_call.1} parent=1 // pred_check
      _
    $region11: #{tpu_custom_call.1} parent=1 // pred_check_branch
      %38 = sbr.rel (0) target = $region13
    $region12: #{tpu_custom_call.1} parent=1 // pred_region
      %40 = vsyncadd [#allocation6], 0
      %s41 = sshll.u32 %s2, 4
      %s42 = int_to_ptr.hbm [resolvable:$true] %s41
      %s43 = sshll.u32 [#allocation7], 4
      %s44 = int_to_ptr.vmem [resolvable:$true] %s43
      %49 = dma.hbm_to_vmem [thread:$0]  %s42, 1024, %s44, [#allocation6], 64, 64, 4
    $region13: #{tpu_custom_call.1} parent=1 // pred_fallthru
      _
    // Predicated region
    $region14: #{tpu_custom_call.1} parent=1 // pred_check
      _
    $region15: #{tpu_custom_call.1} parent=1 // pred_check_branch
      %51 = sbr.rel (0) target = $region17
    $region16: #{tpu_custom_call.1} parent=1 // pred_region
      %53 = vsyncadd [#allocation9], 0
      %s54 = sshll.u32 %s3, 4
      %s55 = int_to_ptr.hbm [resolvable:$true] %s54
      %s56 = sshll.u32 [#allocation8], 4
      %s57 = int_to_ptr.vmem [resolvable:$true] %s56
      %62 = dma.hbm_to_vmem [thread:$0]  %s55, 1024, %s57, [#allocation9], 64, 64, 4
    $region17: #{tpu_custom_call.1} parent=1 // pred_fallthru
      _
    // Predicated region
    $region18: #{tpu_custom_call.1} parent=1 // pred_check
      _
    $region19: #{tpu_custom_call.1} parent=1 // pred_check_branch
      %64 = sbr.rel (0) target = $region21
    $region20: #{tpu_custom_call.1} parent=1 // pred_region
      %66 = dma.done [#allocation3], 512
    $region21: #{tpu_custom_call.1} parent=1 // pred_fallthru
      _
    // Predicated region
    $region22: #{tpu_custom_call.1} parent=1 // pred_check
      _
    $region23: #{tpu_custom_call.1} parent=1 // pred_check_branch
      %68 = sbr.rel (0) target = $region25
    $region24: #{tpu_custom_call.1} parent=1 // pred_region
      %70 = dma.done [#allocation6], 8192
    $region25: #{tpu_custom_call.1} parent=1 // pred_fallthru
      _
    // Predicated region
    $region26: #{tpu_custom_call.1} parent=1 // pred_check
      _
    $region27: #{tpu_custom_call.1} parent=1 // pred_check_branch
      %72 = sbr.rel (0) target = $region29
    $region28: #{tpu_custom_call.1} parent=1 // pred_region
      %74 = dma.done [#allocation6], 1024
    $region29: #{tpu_custom_call.1} parent=1 // pred_fallthru
      _
    // Predicated region
    $region30: #{tpu_custom_call.1} parent=1 // pred_check
      _
    $region31: #{tpu_custom_call.1} parent=1 // pred_check_branch
      %76 = sbr.rel (0) target = $region33
    $region32: #{tpu_custom_call.1} parent=1 // pred_region
      %78 = dma.done [#allocation9], 1024
    $region33: #{tpu_custom_call.1} parent=1 // pred_fallthru
      _
    %v79 = vld [vmem:[#allocation2] sm:$0xff]
    %v80 = vld [vmem:[#allocation2 + $0x8] sm:$0xff]
    %v81 = vld [vmem:[#allocation2 + $0x10] sm:$0xff]
    %v82 = vld [vmem:[#allocation2 + $0x18] sm:$0xff]
    %v83 = vld [vmem:[#allocation5] sm:$0xf]
    %v84 = vld [vmem:[#allocation5 + $0x4] sm:$0xf]
    %v85 = vld [vmem:[#allocation5 + $0x8] sm:$0xf]
    %v86 = vld [vmem:[#allocation5 + $0xc] sm:$0xf]
    %v87 = vld [vmem:[#allocation5 + $0x10] sm:$0xf]
    %v88 = vld [vmem:[#allocation5 + $0x14] sm:$0xf]
    %v89 = vld [vmem:[#allocation5 + $0x18] sm:$0xf]
    %v90 = vld [vmem:[#allocation5 + $0x1c] sm:$0xf]
    %v91 = vld [vmem:[#allocation5 + $0x20] sm:$0xf]
    %v92 = vld [vmem:[#allocation5 + $0x24] sm:$0xf]
    %v93 = vld [vmem:[#allocation5 + $0x28] sm:$0xf]
    %v94 = vld [vmem:[#allocation5 + $0x2c] sm:$0xf]
    %v95 = vld [vmem:[#allocation5 + $0x30] sm:$0xf]
    %v96 = vld [vmem:[#allocation5 + $0x34] sm:$0xf]
    %v97 = vld [vmem:[#allocation5 + $0x38] sm:$0xf]
    %v98 = vld [vmem:[#allocation5 + $0x3c] sm:$0xf]
    %v99 = vld [vmem:[#allocation5 + $0x40] sm:$0xf]
    %v100 = vld [vmem:[#allocation5 + $0x44] sm:$0xf]
    %v101 = vld [vmem:[#allocation5 + $0x48] sm:$0xf]
    %v102 = vld [vmem:[#allocation5 + $0x4c] sm:$0xf]
    %v103 = vld [vmem:[#allocation5 + $0x50] sm:$0xf]
    %v104 = vld [vmem:[#allocation5 + $0x54] sm:$0xf]
    %v105 = vld [vmem:[#allocation5 + $0x58] sm:$0xf]
    %v106 = vld [vmem:[#allocation5 + $0x5c] sm:$0xf]
    %v107 = vld [vmem:[#allocation5 + $0x60] sm:$0xf]
    %v108 = vld [vmem:[#allocation5 + $0x64] sm:$0xf]
    %v109 = vld [vmem:[#allocation5 + $0x68] sm:$0xf]
    %v110 = vld [vmem:[#allocation5 + $0x6c] sm:$0xf]
    %v111 = vld [vmem:[#allocation5 + $0x70] sm:$0xf]
    %v112 = vld [vmem:[#allocation5 + $0x74] sm:$0xf]
    %v113 = vld [vmem:[#allocation5 + $0x78] sm:$0xf]
    %v114 = vld [vmem:[#allocation5 + $0x7c] sm:$0xf]
    %v115 = vld [vmem:[#allocation5 + $0x80] sm:$0xf]
    %v116 = vld [vmem:[#allocation5 + $0x84] sm:$0xf]
    %v117 = vld [vmem:[#allocation5 + $0x88] sm:$0xf]
    %v118 = vld [vmem:[#allocation5 + $0x8c] sm:$0xf]
    %v119 = vld [vmem:[#allocation5 + $0x90] sm:$0xf]
    %v120 = vld [vmem:[#allocation5 + $0x94] sm:$0xf]
    %v121 = vld [vmem:[#allocation5 + $0x98] sm:$0xf]
    %v122 = vld [vmem:[#allocation5 + $0x9c] sm:$0xf]
    %v123 = vld [vmem:[#allocation5 + $0xa0] sm:$0xf]
    %v124 = vld [vmem:[#allocation5 + $0xa4] sm:$0xf]
    %v125 = vld [vmem:[#allocation5 + $0xa8] sm:$0xf]
    %v126 = vld [vmem:[#allocation5 + $0xac] sm:$0xf]
    %v127 = vld [vmem:[#allocation5 + $0xb0] sm:$0xf]
    %v128 = vld [vmem:[#allocation5 + $0xb4] sm:$0xf]
    %v129 = vld [vmem:[#allocation5 + $0xb8] sm:$0xf]
    %v130 = vld [vmem:[#allocation5 + $0xbc] sm:$0xf]
    %v131 = vld [vmem:[#allocation5 + $0xc0] sm:$0xf]
    %v132 = vld [vmem:[#allocation5 + $0xc4] sm:$0xf]
    %v133 = vld [vmem:[#allocation5 + $0xc8] sm:$0xf]
    %v134 = vld [vmem:[#allocation5 + $0xcc] sm:$0xf]
    %v135 = vld [vmem:[#allocation5 + $0xd0] sm:$0xf]
    %v136 = vld [vmem:[#allocation5 + $0xd4] sm:$0xf]
    %v137 = vld [vmem:[#allocation5 + $0xd8] sm:$0xf]
    %v138 = vld [vmem:[#allocation5 + $0xdc] sm:$0xf]
    %v139 = vld [vmem:[#allocation5 + $0xe0] sm:$0xf]
    %v140 = vld [vmem:[#allocation5 + $0xe4] sm:$0xf]
    %v141 = vld [vmem:[#allocation5 + $0xe8] sm:$0xf]
    %v142 = vld [vmem:[#allocation5 + $0xec] sm:$0xf]
    %v143 = vld [vmem:[#allocation5 + $0xf0] sm:$0xf]
    %v144 = vld [vmem:[#allocation5 + $0xf4] sm:$0xf]
    %v145 = vld [vmem:[#allocation5 + $0xf8] sm:$0xf]
    %v146 = vld [vmem:[#allocation5 + $0xfc] sm:$0xf]
    %v147 = vld [vmem:[#allocation5 + $0x100] sm:$0xf]
    %v148 = vld [vmem:[#allocation5 + $0x104] sm:$0xf]
    %v149 = vld [vmem:[#allocation5 + $0x108] sm:$0xf]
    %v150 = vld [vmem:[#allocation5 + $0x10c] sm:$0xf]
    %v151 = vld [vmem:[#allocation5 + $0x110] sm:$0xf]
    %v152 = vld [vmem:[#allocation5 + $0x114] sm:$0xf]
    %v153 = vld [vmem:[#allocation5 + $0x118] sm:$0xf]
    %v154 = vld [vmem:[#allocation5 + $0x11c] sm:$0xf]
    %v155 = vld [vmem:[#allocation5 + $0x120] sm:$0xf]
    %v156 = vld [vmem:[#allocation5 + $0x124] sm:$0xf]
    %v157 = vld [vmem:[#allocation5 + $0x128] sm:$0xf]
    %v158 = vld [vmem:[#allocation5 + $0x12c] sm:$0xf]
    %v159 = vld [vmem:[#allocation5 + $0x130] sm:$0xf]
    %v160 = vld [vmem:[#allocation5 + $0x134] sm:$0xf]
    %v161 = vld [vmem:[#allocation5 + $0x138] sm:$0xf]
    %v162 = vld [vmem:[#allocation5 + $0x13c] sm:$0xf]
    %v163 = vld [vmem:[#allocation5 + $0x140] sm:$0xf]
    %v164 = vld [vmem:[#allocation5 + $0x144] sm:$0xf]
    %v165 = vld [vmem:[#allocation5 + $0x148] sm:$0xf]
    %v166 = vld [vmem:[#allocation5 + $0x14c] sm:$0xf]
    %v167 = vld [vmem:[#allocation5 + $0x150] sm:$0xf]
    %v168 = vld [vmem:[#allocation5 + $0x154] sm:$0xf]
    %v169 = vld [vmem:[#allocation5 + $0x158] sm:$0xf]
    %v170 = vld [vmem:[#allocation5 + $0x15c] sm:$0xf]
    %v171 = vld [vmem:[#allocation5 + $0x160] sm:$0xf]
    %v172 = vld [vmem:[#allocation5 + $0x164] sm:$0xf]
    %v173 = vld [vmem:[#allocation5 + $0x168] sm:$0xf]
    %v174 = vld [vmem:[#allocation5 + $0x16c] sm:$0xf]
    %v175 = vld [vmem:[#allocation5 + $0x170] sm:$0xf]
    %v176 = vld [vmem:[#allocation5 + $0x174] sm:$0xf]
    %v177 = vld [vmem:[#allocation5 + $0x178] sm:$0xf]
    %v178 = vld [vmem:[#allocation5 + $0x17c] sm:$0xf]
    %v179 = vld [vmem:[#allocation5 + $0x180] sm:$0xf]
    %v180 = vld [vmem:[#allocation5 + $0x184] sm:$0xf]
    %v181 = vld [vmem:[#allocation5 + $0x188] sm:$0xf]
    %v182 = vld [vmem:[#allocation5 + $0x18c] sm:$0xf]
    %v183 = vld [vmem:[#allocation5 + $0x190] sm:$0xf]
    %v184 = vld [vmem:[#allocation5 + $0x194] sm:$0xf]
    %v185 = vld [vmem:[#allocation5 + $0x198] sm:$0xf]
    %v186 = vld [vmem:[#allocation5 + $0x19c] sm:$0xf]
    %v187 = vld [vmem:[#allocation5 + $0x1a0] sm:$0xf]
    %v188 = vld [vmem:[#allocation5 + $0x1a4] sm:$0xf]
    %v189 = vld [vmem:[#allocation5 + $0x1a8] sm:$0xf]
    %v190 = vld [vmem:[#allocation5 + $0x1ac] sm:$0xf]
    %v191 = vld [vmem:[#allocation5 + $0x1b0] sm:$0xf]
    %v192 = vld [vmem:[#allocation5 + $0x1b4] sm:$0xf]
    %v193 = vld [vmem:[#allocation5 + $0x1b8] sm:$0xf]
    %v194 = vld [vmem:[#allocation5 + $0x1bc] sm:$0xf]
    %v195 = vld [vmem:[#allocation5 + $0x1c0] sm:$0xf]
    %v196 = vld [vmem:[#allocation5 + $0x1c4] sm:$0xf]
    %v197 = vld [vmem:[#allocation5 + $0x1c8] sm:$0xf]
    %v198 = vld [vmem:[#allocation5 + $0x1cc] sm:$0xf]
    %v199 = vld [vmem:[#allocation5 + $0x1d0] sm:$0xf]
    %v200 = vld [vmem:[#allocation5 + $0x1d4] sm:$0xf]
    %v201 = vld [vmem:[#allocation5 + $0x1d8] sm:$0xf]
    %v202 = vld [vmem:[#allocation5 + $0x1dc] sm:$0xf]
    %v203 = vld [vmem:[#allocation5 + $0x1e0] sm:$0xf]
    %v204 = vld [vmem:[#allocation5 + $0x1e4] sm:$0xf]
    %v205 = vld [vmem:[#allocation5 + $0x1e8] sm:$0xf]
    %v206 = vld [vmem:[#allocation5 + $0x1ec] sm:$0xf]
    %v207 = vld [vmem:[#allocation5 + $0x1f0] sm:$0xf]
    %v208 = vld [vmem:[#allocation5 + $0x1f4] sm:$0xf]
    %v209 = vld [vmem:[#allocation5 + $0x1f8] sm:$0xf]
    %v210 = vld [vmem:[#allocation5 + $0x1fc] sm:$0xf]
    %v215 = vunpack.c.l.b16 %v79
    %v216 = vunpack.c.h.b16 %v79
    %v217 = vunpack.c.l.b16 %v80
    %v218 = vunpack.c.h.b16 %v80
    %v219 = vunpack.c.l.b16 %v81
    %v220 = vunpack.c.h.b16 %v81
    %v221 = vunpack.c.l.b16 %v82
    %v222 = vunpack.c.h.b16 %v82
    %v223 = vpack.c.b16 %v215, %v215
    %v224 = vpack.c.b16 %v216, %v216
    %v225 = vpack.c.b16 %v217, %v217
    %v226 = vpack.c.b16 %v218, %v218
    %v227 = vpack.c.b16 %v219, %v219
    %v228 = vpack.c.b16 %v220, %v220
    %v229 = vpack.c.b16 %v221, %v221
    %v230 = vpack.c.b16 %v222, %v222
    %v367 = vunpack.c.l.b16 %v83
    %v368 = vunpack.c.l.b16 %v84
    %v369 = vunpack.c.l.b16 %v85
    %v370 = vunpack.c.l.b16 %v86
    %v371 = vunpack.c.l.b16 %v87
    %v372 = vunpack.c.l.b16 %v88
    %v373 = vunpack.c.l.b16 %v89
    %v374 = vunpack.c.l.b16 %v90
    %v375 = vunpack.c.l.b16 %v91
    %v376 = vunpack.c.l.b16 %v92
    %v377 = vunpack.c.l.b16 %v93
    %v378 = vunpack.c.l.b16 %v94
    %v379 = vunpack.c.l.b16 %v95
    %v380 = vunpack.c.l.b16 %v96
    %v381 = vunpack.c.l.b16 %v97
    %v382 = vunpack.c.l.b16 %v98
    %v383 = vunpack.c.l.b16 %v99
    %v384 = vunpack.c.l.b16 %v100
    %v385 = vunpack.c.l.b16 %v101
    %v386 = vunpack.c.l.b16 %v102
    %v387 = vunpack.c.l.b16 %v103
    %v388 = vunpack.c.l.b16 %v104
    %v389 = vunpack.c.l.b16 %v105
    %v390 = vunpack.c.l.b16 %v106
    %v391 = vunpack.c.l.b16 %v107
    %v392 = vunpack.c.l.b16 %v108
    %v393 = vunpack.c.l.b16 %v109
    %v394 = vunpack.c.l.b16 %v110
    %v395 = vunpack.c.l.b16 %v111
    %v396 = vunpack.c.l.b16 %v112
    %v397 = vunpack.c.l.b16 %v113
    %v398 = vunpack.c.l.b16 %v114
    %v399 = vunpack.c.l.b16 %v115
    %v400 = vunpack.c.l.b16 %v116
    %v401 = vunpack.c.l.b16 %v117
    %v402 = vunpack.c.l.b16 %v118
    %v403 = vunpack.c.l.b16 %v119
    %v404 = vunpack.c.l.b16 %v120
    %v405 = vunpack.c.l.b16 %v121
    %v406 = vunpack.c.l.b16 %v122
    %v407 = vunpack.c.l.b16 %v123
    %v408 = vunpack.c.l.b16 %v124
    %v409 = vunpack.c.l.b16 %v125
    %v410 = vunpack.c.l.b16 %v126
    %v411 = vunpack.c.l.b16 %v127
    %v412 = vunpack.c.l.b16 %v128
    %v413 = vunpack.c.l.b16 %v129
    %v414 = vunpack.c.l.b16 %v130
    %v415 = vunpack.c.l.b16 %v131
    %v416 = vunpack.c.l.b16 %v132
    %v417 = vunpack.c.l.b16 %v133
    %v418 = vunpack.c.l.b16 %v134
    %v419 = vunpack.c.l.b16 %v135
    %v420 = vunpack.c.l.b16 %v136
    %v421 = vunpack.c.l.b16 %v137
    %v422 = vunpack.c.l.b16 %v138
    %v423 = vunpack.c.l.b16 %v139
    %v424 = vunpack.c.l.b16 %v140
    %v425 = vunpack.c.l.b16 %v141
    %v426 = vunpack.c.l.b16 %v142
    %v427 = vunpack.c.l.b16 %v143
    %v428 = vunpack.c.l.b16 %v144
    %v429 = vunpack.c.l.b16 %v145
    %v430 = vunpack.c.l.b16 %v146
    %v431 = vunpack.c.l.b16 %v147
    %v432 = vunpack.c.l.b16 %v148
    %v433 = vunpack.c.l.b16 %v149
    %v434 = vunpack.c.l.b16 %v150
    %v435 = vunpack.c.l.b16 %v151
    %v436 = vunpack.c.l.b16 %v152
    %v437 = vunpack.c.l.b16 %v153
    %v438 = vunpack.c.l.b16 %v154
    %v439 = vunpack.c.l.b16 %v155
    %v440 = vunpack.c.l.b16 %v156
    %v441 = vunpack.c.l.b16 %v157
    %v442 = vunpack.c.l.b16 %v158
    %v443 = vunpack.c.l.b16 %v159
    %v444 = vunpack.c.l.b16 %v160
    %v445 = vunpack.c.l.b16 %v161
    %v446 = vunpack.c.l.b16 %v162
    %v447 = vunpack.c.l.b16 %v163
    %v448 = vunpack.c.l.b16 %v164
    %v449 = vunpack.c.l.b16 %v165
    %v450 = vunpack.c.l.b16 %v166
    %v451 = vunpack.c.l.b16 %v167
    %v452 = vunpack.c.l.b16 %v168
    %v453 = vunpack.c.l.b16 %v169
    %v454 = vunpack.c.l.b16 %v170
    %v455 = vunpack.c.l.b16 %v171
    %v456 = vunpack.c.l.b16 %v172
    %v457 = vunpack.c.l.b16 %v173
    %v458 = vunpack.c.l.b16 %v174
    %v459 = vunpack.c.l.b16 %v175
    %v460 = vunpack.c.l.b16 %v176
    %v461 = vunpack.c.l.b16 %v177
    %v462 = vunpack.c.l.b16 %v178
    %v463 = vunpack.c.l.b16 %v179
    %v464 = vunpack.c.l.b16 %v180
    %v465 = vunpack.c.l.b16 %v181
    %v466 = vunpack.c.l.b16 %v182
    %v467 = vunpack.c.l.b16 %v183
    %v468 = vunpack.c.l.b16 %v184
    %v469 = vunpack.c.l.b16 %v185
    %v470 = vunpack.c.l.b16 %v186
    %v471 = vunpack.c.l.b16 %v187
    %v472 = vunpack.c.l.b16 %v188
    %v473 = vunpack.c.l.b16 %v189
    %v474 = vunpack.c.l.b16 %v190
    %v475 = vunpack.c.l.b16 %v191
    %v476 = vunpack.c.l.b16 %v192
    %v477 = vunpack.c.l.b16 %v193
    %v478 = vunpack.c.l.b16 %v194
    %v479 = vunpack.c.l.b16 %v195
    %v480 = vunpack.c.l.b16 %v196
    %v481 = vunpack.c.l.b16 %v197
    %v482 = vunpack.c.l.b16 %v198
    %v483 = vunpack.c.l.b16 %v199
    %v484 = vunpack.c.l.b16 %v200
    %v485 = vunpack.c.l.b16 %v201
    %v486 = vunpack.c.l.b16 %v202
    %v487 = vunpack.c.l.b16 %v203
    %v488 = vunpack.c.l.b16 %v204
    %v489 = vunpack.c.l.b16 %v205
    %v490 = vunpack.c.l.b16 %v206
    %v491 = vunpack.c.l.b16 %v207
    %v492 = vunpack.c.l.b16 %v208
    %v493 = vunpack.c.l.b16 %v209
    %v494 = vunpack.c.l.b16 %v210
    %v495 = vpack.c.b16 %v368, %v367
    %v496 = vpack.c.b16 %v370, %v369
    %v497 = vpack.c.b16 %v372, %v371
    %v498 = vpack.c.b16 %v374, %v373
    %v499 = vpack.c.b16 %v376, %v375
    %v500 = vpack.c.b16 %v378, %v377
    %v501 = vpack.c.b16 %v380, %v379
    %v502 = vpack.c.b16 %v382, %v381
    %v503 = vpack.c.b16 %v384, %v383
    %v504 = vpack.c.b16 %v386, %v385
    %v505 = vpack.c.b16 %v388, %v387
    %v506 = vpack.c.b16 %v390, %v389
    %v507 = vpack.c.b16 %v392, %v391
    %v508 = vpack.c.b16 %v394, %v393
    %v509 = vpack.c.b16 %v396, %v395
    %v510 = vpack.c.b16 %v398, %v397
    %v511 = vpack.c.b16 %v400, %v399
    %v512 = vpack.c.b16 %v402, %v401
    %v513 = vpack.c.b16 %v404, %v403
    %v514 = vpack.c.b16 %v406, %v405
    %v515 = vpack.c.b16 %v408, %v407
    %v516 = vpack.c.b16 %v410, %v409
    %v517 = vpack.c.b16 %v412, %v411
    %v518 = vpack.c.b16 %v414, %v413
    %v519 = vpack.c.b16 %v416, %v415
    %v520 = vpack.c.b16 %v418, %v417
    %v521 = vpack.c.b16 %v420, %v419
    %v522 = vpack.c.b16 %v422, %v421
    %v523 = vpack.c.b16 %v424, %v423
    %v524 = vpack.c.b16 %v426, %v425
    %v525 = vpack.c.b16 %v428, %v427
    %v526 = vpack.c.b16 %v430, %v429
    %v527 = vpack.c.b16 %v432, %v431
    %v528 = vpack.c.b16 %v434, %v433
    %v529 = vpack.c.b16 %v436, %v435
    %v530 = vpack.c.b16 %v438, %v437
    %v531 = vpack.c.b16 %v440, %v439
    %v532 = vpack.c.b16 %v442, %v441
    %v533 = vpack.c.b16 %v444, %v443
    %v534 = vpack.c.b16 %v446, %v445
    %v535 = vpack.c.b16 %v448, %v447
    %v536 = vpack.c.b16 %v450, %v449
    %v537 = vpack.c.b16 %v452, %v451
    %v538 = vpack.c.b16 %v454, %v453
    %v539 = vpack.c.b16 %v456, %v455
    %v540 = vpack.c.b16 %v458, %v457
    %v541 = vpack.c.b16 %v460, %v459
    %v542 = vpack.c.b16 %v462, %v461
    %v543 = vpack.c.b16 %v464, %v463
    %v544 = vpack.c.b16 %v466, %v465
    %v545 = vpack.c.b16 %v468, %v467
    %v546 = vpack.c.b16 %v470, %v469
    %v547 = vpack.c.b16 %v472, %v471
    %v548 = vpack.c.b16 %v474, %v473
    %v549 = vpack.c.b16 %v476, %v475
    %v550 = vpack.c.b16 %v478, %v477
    %v551 = vpack.c.b16 %v480, %v479
    %v552 = vpack.c.b16 %v482, %v481
    %v553 = vpack.c.b16 %v484, %v483
    %v554 = vpack.c.b16 %v486, %v485
    %v555 = vpack.c.b16 %v488, %v487
    %v556 = vpack.c.b16 %v490, %v489
    %v557 = vpack.c.b16 %v492, %v491
    %v558 = vpack.c.b16 %v494, %v493
    %623 = vmatpush.bf16.msra.mxu0 %v502
    %624 = vmatpush.bf16.msra.mxu0 %v501
    %625 = vmatpush.bf16.msra.mxu0 %v500
    %626 = vmatpush.bf16.msra.mxu0 %v499
    %627 = vmatpush.bf16.msra.mxu0 %v498
    %628 = vmatpush.bf16.msra.mxu0 %v497
    %629 = vmatpush.bf16.msra.mxu0 %v496
    %630 = vmatpush.bf16.msra.mxu0 %v495
    %631 = vmatmul.bf16.gmra.mxu0 %v223
    %v632 = vpop.f32.mrf.mxu0
    %v633 = vadd.f32 0.0, %v632
    %v634 = vpop.f32.mrf.mxu0
    %635 = vdwg.mxu0
    %636 = vmatpush.bf16.msra.mxu0 %v510
    %637 = vmatpush.bf16.msra.mxu0 %v509
    %638 = vmatpush.bf16.msra.mxu0 %v508
    %639 = vmatpush.bf16.msra.mxu0 %v507
    %640 = vmatpush.bf16.msra.mxu0 %v506
    %641 = vmatpush.bf16.msra.mxu0 %v505
    %642 = vmatpush.bf16.msra.mxu0 %v504
    %643 = vmatpush.bf16.msra.mxu0 %v503
    %644 = vmatmul.bf16.gmra.mxu0 %v224
    %v645 = vpop.f32.mrf.mxu0
    %v646 = vadd.f32 %v633, %v645
    %v647 = vpop.f32.mrf.mxu0
    %648 = vdwg.mxu0
    %649 = vmatpush.bf16.msra.mxu0 %v518
    %650 = vmatpush.bf16.msra.mxu0 %v517
    %651 = vmatpush.bf16.msra.mxu0 %v516
    %652 = vmatpush.bf16.msra.mxu0 %v515
    %653 = vmatpush.bf16.msra.mxu0 %v514
    %654 = vmatpush.bf16.msra.mxu0 %v513
    %655 = vmatpush.bf16.msra.mxu0 %v512
    %656 = vmatpush.bf16.msra.mxu0 %v511
    %657 = vmatmul.bf16.gmra.mxu0 %v225
    %v658 = vpop.f32.mrf.mxu0
    %v659 = vadd.f32 %v646, %v658
    %v660 = vpop.f32.mrf.mxu0
    %661 = vdwg.mxu0
    %662 = vmatpush.bf16.msra.mxu0 %v526
    %663 = vmatpush.bf16.msra.mxu0 %v525
    %664 = vmatpush.bf16.msra.mxu0 %v524
    %665 = vmatpush.bf16.msra.mxu0 %v523
    %666 = vmatpush.bf16.msra.mxu0 %v522
    %667 = vmatpush.bf16.msra.mxu0 %v521
    %668 = vmatpush.bf16.msra.mxu0 %v520
    %669 = vmatpush.bf16.msra.mxu0 %v519
    %670 = vmatmul.bf16.gmra.mxu0 %v226
    %v671 = vpop.f32.mrf.mxu0
    %v672 = vadd.f32 %v659, %v671
    %v673 = vpop.f32.mrf.mxu0
    %674 = vdwg.mxu0
    %675 = vmatpush.bf16.msra.mxu0 %v534
    %676 = vmatpush.bf16.msra.mxu0 %v533
    %677 = vmatpush.bf16.msra.mxu0 %v532
    %678 = vmatpush.bf16.msra.mxu0 %v531
    %679 = vmatpush.bf16.msra.mxu0 %v530
    %680 = vmatpush.bf16.msra.mxu0 %v529
    %681 = vmatpush.bf16.msra.mxu0 %v528
    %682 = vmatpush.bf16.msra.mxu0 %v527
    %683 = vmatmul.bf16.gmra.mxu0 %v227
    %v684 = vpop.f32.mrf.mxu0
    %v685 = vadd.f32 %v672, %v684
    %v686 = vpop.f32.mrf.mxu0
    %687 = vdwg.mxu0
    %688 = vmatpush.bf16.msra.mxu0 %v542
    %689 = vmatpush.bf16.msra.mxu0 %v541
    %690 = vmatpush.bf16.msra.mxu0 %v540
    %691 = vmatpush.bf16.msra.mxu0 %v539
    %692 = vmatpush.bf16.msra.mxu0 %v538
    %693 = vmatpush.bf16.msra.mxu0 %v537
    %694 = vmatpush.bf16.msra.mxu0 %v536
    %695 = vmatpush.bf16.msra.mxu0 %v535
    %696 = vmatmul.bf16.gmra.mxu0 %v228
    %v697 = vpop.f32.mrf.mxu0
    %v698 = vadd.f32 %v685, %v697
    %v699 = vpop.f32.mrf.mxu0
    %700 = vdwg.mxu0
    %701 = vmatpush.bf16.msra.mxu0 %v550
    %702 = vmatpush.bf16.msra.mxu0 %v549
    %703 = vmatpush.bf16.msra.mxu0 %v548
    %704 = vmatpush.bf16.msra.mxu0 %v547
    %705 = vmatpush.bf16.msra.mxu0 %v546
    %706 = vmatpush.bf16.msra.mxu0 %v545
    %707 = vmatpush.bf16.msra.mxu0 %v544
    %708 = vmatpush.bf16.msra.mxu0 %v543
    %709 = vmatmul.bf16.gmra.mxu0 %v229
    %v710 = vpop.f32.mrf.mxu0
    %v711 = vadd.f32 %v698, %v710
    %v712 = vpop.f32.mrf.mxu0
    %713 = vdwg.mxu0
    %714 = vmatpush.bf16.msra.mxu0 %v558
    %715 = vmatpush.bf16.msra.mxu0 %v557
    %716 = vmatpush.bf16.msra.mxu0 %v556
    %717 = vmatpush.bf16.msra.mxu0 %v555
    %718 = vmatpush.bf16.msra.mxu0 %v554
    %719 = vmatpush.bf16.msra.mxu0 %v553
    %720 = vmatpush.bf16.msra.mxu0 %v552
    %721 = vmatpush.bf16.msra.mxu0 %v551
    %722 = vmatmul.bf16.gmra.mxu0 %v230
    %v723 = vpop.f32.mrf.mxu0
    %v724 = vadd.f32 %v711, %v723
    %v725 = vpop.f32.mrf.mxu0
    %726 = vdwg.mxu0
    %v727 = vmax.f32 %v724, 0.0
    %v728 = vpack.c.bf16 %v727, %v727
    %v729 = vld [vmem:[#allocation7] sm:$0xf]
    %v730 = vld [vmem:[#allocation7 + $0x4] sm:$0xf]
    %v731 = vld [vmem:[#allocation7 + $0x8] sm:$0xf]
    %v732 = vld [vmem:[#allocation7 + $0xc] sm:$0xf]
    %v733 = vld [vmem:[#allocation7 + $0x10] sm:$0xf]
    %v734 = vld [vmem:[#allocation7 + $0x14] sm:$0xf]
    %v735 = vld [vmem:[#allocation7 + $0x18] sm:$0xf]
    %v736 = vld [vmem:[#allocation7 + $0x1c] sm:$0xf]
    %v737 = vld [vmem:[#allocation7 + $0x20] sm:$0xf]
    %v738 = vld [vmem:[#allocation7 + $0x24] sm:$0xf]
    %v739 = vld [vmem:[#allocation7 + $0x28] sm:$0xf]
    %v740 = vld [vmem:[#allocation7 + $0x2c] sm:$0xf]
    %v741 = vld [vmem:[#allocation7 + $0x30] sm:$0xf]
    %v742 = vld [vmem:[#allocation7 + $0x34] sm:$0xf]
    %v743 = vld [vmem:[#allocation7 + $0x38] sm:$0xf]
    %v744 = vld [vmem:[#allocation7 + $0x3c] sm:$0xf]
    %v761 = vunpack.c.l.b16 %v729
    %v762 = vunpack.c.l.b16 %v730
    %v763 = vunpack.c.l.b16 %v731
    %v764 = vunpack.c.l.b16 %v732
    %v765 = vunpack.c.l.b16 %v733
    %v766 = vunpack.c.l.b16 %v734
    %v767 = vunpack.c.l.b16 %v735
    %v768 = vunpack.c.l.b16 %v736
    %v769 = vunpack.c.l.b16 %v737
    %v770 = vunpack.c.l.b16 %v738
    %v771 = vunpack.c.l.b16 %v739
    %v772 = vunpack.c.l.b16 %v740
    %v773 = vunpack.c.l.b16 %v741
    %v774 = vunpack.c.l.b16 %v742
    %v775 = vunpack.c.l.b16 %v743
    %v776 = vunpack.c.l.b16 %v744
    %v777 = vpack.c.b16 %v762, %v761
    %v778 = vpack.c.b16 %v764, %v763
    %v779 = vpack.c.b16 %v766, %v765
    %v780 = vpack.c.b16 %v768, %v767
    %v781 = vpack.c.b16 %v770, %v769
    %v782 = vpack.c.b16 %v772, %v771
    %v783 = vpack.c.b16 %v774, %v773
    %v784 = vpack.c.b16 %v776, %v775
    %793 = vmatpush.bf16.msra.mxu0 %v784
    %794 = vmatpush.bf16.msra.mxu0 %v783
    %795 = vmatpush.bf16.msra.mxu0 %v782
    %796 = vmatpush.bf16.msra.mxu0 %v781
    %797 = vmatpush.bf16.msra.mxu0 %v780
    %798 = vmatpush.bf16.msra.mxu0 %v779
    %799 = vmatpush.bf16.msra.mxu0 %v778
    %800 = vmatpush.bf16.msra.mxu0 %v777
    %801 = vmatmul.bf16.gmra.mxu0 %v728
    %v802 = vpop.f32.mrf.mxu0
    %v803 = vadd.f32 0.0, %v802
    %v804 = vpop.f32.mrf.mxu0
    %805 = vdwg.mxu0
    %v806 = vmax.f32 %v803, 0.0
    %v807 = vpack.c.bf16 %v806, %v806
    %v808 = vld [vmem:[#allocation8] sm:$0xf]
    %v809 = vld [vmem:[#allocation8 + $0x4] sm:$0xf]
    %v810 = vld [vmem:[#allocation8 + $0x8] sm:$0xf]
    %v811 = vld [vmem:[#allocation8 + $0xc] sm:$0xf]
    %v812 = vld [vmem:[#allocation8 + $0x10] sm:$0xf]
    %v813 = vld [vmem:[#allocation8 + $0x14] sm:$0xf]
    %v814 = vld [vmem:[#allocation8 + $0x18] sm:$0xf]
    %v815 = vld [vmem:[#allocation8 + $0x1c] sm:$0xf]
    %v816 = vld [vmem:[#allocation8 + $0x20] sm:$0xf]
    %v817 = vld [vmem:[#allocation8 + $0x24] sm:$0xf]
    %v818 = vld [vmem:[#allocation8 + $0x28] sm:$0xf]
    %v819 = vld [vmem:[#allocation8 + $0x2c] sm:$0xf]
    %v820 = vld [vmem:[#allocation8 + $0x30] sm:$0xf]
    %v821 = vld [vmem:[#allocation8 + $0x34] sm:$0xf]
    %v822 = vld [vmem:[#allocation8 + $0x38] sm:$0xf]
    %v823 = vld [vmem:[#allocation8 + $0x3c] sm:$0xf]
    %v840 = vunpack.c.l.b16 %v808
    %v841 = vunpack.c.l.b16 %v809
    %v842 = vunpack.c.l.b16 %v810
    %v843 = vunpack.c.l.b16 %v811
    %v844 = vunpack.c.l.b16 %v812
    %v845 = vunpack.c.l.b16 %v813
    %v846 = vunpack.c.l.b16 %v814
    %v847 = vunpack.c.l.b16 %v815
    %v848 = vunpack.c.l.b16 %v816
    %v849 = vunpack.c.l.b16 %v817
    %v850 = vunpack.c.l.b16 %v818
    %v851 = vunpack.c.l.b16 %v819
    %v852 = vunpack.c.l.b16 %v820
    %v853 = vunpack.c.l.b16 %v821
    %v854 = vunpack.c.l.b16 %v822
    %v855 = vunpack.c.l.b16 %v823
    %v856 = vpack.c.b16 %v841, %v840
    %v857 = vpack.c.b16 %v843, %v842
    %v858 = vpack.c.b16 %v845, %v844
    %v859 = vpack.c.b16 %v847, %v846
    %v860 = vpack.c.b16 %v849, %v848
    %v861 = vpack.c.b16 %v851, %v850
    %v862 = vpack.c.b16 %v853, %v852
    %v863 = vpack.c.b16 %v855, %v854
    %872 = vmatpush.bf16.msra.mxu0 %v863
    %873 = vmatpush.bf16.msra.mxu0 %v862
    %874 = vmatpush.bf16.msra.mxu0 %v861
    %875 = vmatpush.bf16.msra.mxu0 %v860
    %876 = vmatpush.bf16.msra.mxu0 %v859
    %877 = vmatpush.bf16.msra.mxu0 %v858
    %878 = vmatpush.bf16.msra.mxu0 %v857
    %879 = vmatpush.bf16.msra.mxu0 %v856
    %880 = vmatmul.bf16.gmra.mxu0 %v807
    %v881 = vpop.f32.mrf.mxu0
    %v882 = vadd.f32 0.0, %v881
    %v883 = vpop.f32.mrf.mxu0
    %884 = vdwg.mxu0
    %885 = vst [vmem:[#allocation10] sm:$0xff] %v882
    // Predicated region
    $region34: #{tpu_custom_call.1} parent=1 // pred_check
      _
    $region35: #{tpu_custom_call.1} parent=1 // pred_check_branch
      %887 = sbr.rel (0) target = $region37
    $region36: #{tpu_custom_call.1} parent=1 // pred_region
      %889 = vsyncadd [#allocation4], 0
      %s891 = sshll.u32 [#allocation10], 4
      %s892 = int_to_ptr.vmem [resolvable:$true] %s891
      %s893 = sshll.u32 %s4, 4
      %s894 = int_to_ptr.hbm [resolvable:$true] %s893
      %896 = dma.vmem_to_hbm [thread:$0]  %s892, 128, %s894, [#allocation4]
    $region37: #{tpu_custom_call.1} parent=1 // pred_fallthru
      _
    // Predicated region
    $region38: #{tpu_custom_call.1} parent=1 // pred_check
      _
    $region39: #{tpu_custom_call.1} parent=1 // pred_check_branch
      %898 = sbr.rel (0) target = $region41
    $region40: #{tpu_custom_call.1} parent=1 // pred_region
      %900 = dma.done [#allocation4], 128
    $region41: #{tpu_custom_call.1} parent=1 // pred_fallthru
      _
    %901 = vsyncpa [#allocation3], 1
    %902 = vsyncpa [#allocation6], 1
    %903 = vsyncpa [#allocation9], 1
    %904 = vsyncpa [#allocation4], 1

</llo_original>
